<compile_context>
chip_gen: v5e
topology: v5e:2x2
jax: 0.10.0
libtpu: 0.0.40
codegen_flags: <defaults>
</compile_context>

<pallas_src>
import functools

import jax
import jax.numpy as jnp
from jax import lax
from jax.experimental import pallas as pl
from jax.experimental.pallas import tpu as pltpu

_INV_SQRT2 = 0.7071067811865476
_SQRT_2_OVER_PI = 0.7978845608028654
_MiB = 1024 * 1024
_SINGLE_BUFFER_MIN_BYTES = 1 * _MiB


def _round_up(x, m):
    return (x + m - 1) // m * m


def _probe_single_buffer():
    """Can this jax build single-buffer a block via pipeline_mode=pl.Buffered(1)?"""
    try:
        pl.BlockSpec((8, 128), lambda i: (0, 0), pipeline_mode=pl.Buffered(1))
        return True
    except Exception:
        return False


_HAS_SINGLE_BUFFER = _probe_single_buffer()


def _const_block_spec(block_shape, index_map, nbytes):
    """BlockSpec for a block whose index never changes over the whole grid.

    The pipeline fetches it exactly once; single-buffer it (halves its VMEM
    footprint) when it is large enough to matter and the API supports it.
    """
    if _HAS_SINGLE_BUFFER and nbytes >= _SINGLE_BUFFER_MIN_BYTES:
        try:
            return pl.BlockSpec(block_shape, index_map, pipeline_mode=pl.Buffered(1))
        except Exception:
            pass
    return pl.BlockSpec(block_shape, index_map)


def _vmem_request_cap():
    """Per-generation VMEM budget: capacity minus 16 MiB compiler headroom."""
    try:
        cap = int(pltpu.get_tpu_info().vmem_capacity_bytes)
    except Exception:
        cap = 64 * _MiB  # unknown chip: assume v7x-sized VMEM
    return max(cap - 16 * _MiB, 24 * _MiB)


def _gelu(h, approximate):
    if approximate:
        # tanh approximation: tanh runs on the EUP slot (frees VALU slots).
        return 0.5 * h * (1.0 + jnp.tanh(_SQRT_2_OVER_PI * (h + 0.044715 * h * h * h)))
    # Exact erf GELU: parity with torch.nn.GELU(approximate="none") default.
    return 0.5 * h * (1.0 + lax.erf(h * _INV_SQRT2))


def _ffn_kernel_resident(x_ref, w1_ref, b1_ref, w2_ref, b2_ref, o_ref, *,
                         approximate_gelu):
    # Whole (padded) hidden dim in one step: no accumulator scratch, output
    # written directly (saves a full f32 tile RMW per row tile).
    h = jnp.dot(x_ref[...], w1_ref[...], preferred_element_type=jnp.float32)
    h = _gelu(h + b1_ref[...].astype(jnp.float32), approximate_gelu)
    # Dropout(p=0.0) is the identity in both train and eval -> no-op.
    # TODO(synk): non-zero dropout would need pltpu.prng_seed/prng_random_bits masking.
    out = jnp.dot(h.astype(w2_ref.dtype), w2_ref[...],
                  preferred_element_type=jnp.float32)
    o_ref[...] = (out + b2_ref[...].astype(jnp.float32)).astype(o_ref.dtype)


def _ffn_kernel_streamed(x_ref, w1_ref, b1_ref, w2_ref, b2_ref, o_ref, acc_ref, *,
                         approximate_gelu):
    # Hidden dimension streamed along the trailing "arbitrary" grid axis,
    # resident f32 accumulator across it.
    k = pl.program_id(1)

    h = jnp.dot(x_ref[...], w1_ref[...], preferred_element_type=jnp.float32)
    h = _gelu(h + b1_ref[...].astype(jnp.float32), approximate_gelu)
    # Dropout(p=0.0) is the identity -> no-op.
    part = jnp.dot(h.astype(w2_ref.dtype), w2_ref[...],
                   preferred_element_type=jnp.float32)

    @pl.when(k == 0)
    def _():
        acc_ref[...] = part          # direct write: no zero-init + RMW

    @pl.when(k != 0)
    def _():
        acc_ref[...] += part

    @pl.when(k == pl.num_programs(1) - 1)
    def _():
        o_ref[...] = (acc_ref[...] + b2_ref[...].astype(jnp.float32)).astype(o_ref.dtype)


def _select_tiles(M, dim, hidden, bpe_x, bpe_w, budget):
    """Pick (tm, th, dim_p, hid_p). Prefer fully VMEM-resident weights."""
    dim_p = _round_up(dim, 128)
    hid_full = _round_up(hidden, 128)
    m8 = _round_up(max(M, 1), 8)

    # Keep >= 2 row tiles when there are enough rows so the "parallel" axis can
    # split across v7x's two TensorCores.
    tm_max = m8
    if M > 128:
        tm_max = min(tm_max, max(128, _round_up(-(-M // 2), 128)))

    def footprint(tm, th, n_k, wbuf):
        bias_rows = 8  # (1, th)/(1, dim_p) blocks pad to 8 sublanes in VMEM
        return (2 * tm * dim_p * bpe_x                 # x row tiles (double-buffered)
                + wbuf * dim_p * th * bpe_w            # W1 chunk(s)
                + wbuf * bias_rows * th * bpe_w        # b1 chunk(s)
                + wbuf * th * dim_p * bpe_w            # W2 chunk(s)
                + 2 * bias_rows * dim_p * bpe_w        # b2
                + 2 * tm * dim_p * bpe_x               # out tiles
                + (tm * dim_p * 4 if n_k > 1 else 0))  # f32 accumulator scratch

    row_candidates = (1024, 512, 384, 256, 128, 64, 32, 16, 8)

    # 1) Weights fully resident (single hidden step): fetched once per call.
    wbuf = 1 if (_HAS_SINGLE_BUFFER
                 and dim_p * hid_full * bpe_w >= _SINGLE_BUFFER_MIN_BYTES) else 2
    for tm in row_candidates:
        tm = min(tm, tm_max)
        if footprint(tm, hid_full, 1, wbuf) <= budget:
            return tm, hid_full, dim_p, hid_full

    # 2) Stream the hidden dimension: big tm first (FLOPs per streamed weight
    #    byte scale with tm), then the biggest th that still fits.
    for tm in row_candidates:
        tm = min(tm, tm_max)
        for th in (2048, 1024, 512, 256, 128):
            th = min(th, hid_full)
            if footprint(tm, th, 2, 2) <= budget:
                return tm, th, dim_p, _round_up(hidden, th)

    # 3) Last resort: minimal tiles.
    return min(8, m8), 128, dim_p, hid_full


def feed_forward(x, w1, b1, w2, b2, *, approximate_gelu=False, compute_dtype=None,
                 vmem_budget_bytes=None):
    """FeedForward forward pass.

    x: (B, N, dim). w1: (dim, hidden). b1: (hidden,). w2: (hidden, dim). b2: (dim,)
    (PyTorch nn.Linear weights passed already transposed for row-major matmul).
    compute_dtype: optionally cast operands (e.g. jnp.bfloat16) for the fast MXU
    path; accumulation stays f32 either way.
    """
    B, N, dim = x.shape
    hidden = w1.shape[1]
    M = B * N

    if compute_dtype is not None:
        x, w1, b1, w2, b2 = (a.astype(compute_dtype) for a in (x, w1, b1, w2, b2))

    bpe_x = jnp.dtype(x.dtype).itemsize
    bpe_w = jnp.dtype(w1.dtype).itemsize

    cap = _vmem_request_cap()
    budget = int(cap * 0.9) if vmem_budget_bytes is None else int(vmem_budget_bytes)
    tm, th, dim_p, hid_p = _select_tiles(M, dim, hidden, bpe_x, bpe_w, budget)

    m_p = _round_up(M, tm)
    n_rows = m_p // tm
    n_k = hid_p // th

    def pad(a, shape):
        widths = tuple((0, t - s) for s, t in zip(a.shape, shape))
        return a if all(w == (0, 0) for w in widths) else jnp.pad(a, widths)

    # Zero padding is exact: padded hidden lanes give GELU(0)=0 and hit zero rows
    # of W2; padded rows / dim columns are sliced off below. For 128-aligned
    # dim/hidden these are no-ops; otherwise prefer pre-padding the weights once
    # outside the per-token forward path.
    x2d = pad(x.reshape(M, dim), (m_p, dim_p))
    w1_p = pad(w1, (dim_p, hid_p))
    b1_p = pad(b1.reshape(1, hidden), (1, hid_p))
    w2_p = pad(w2, (hid_p, dim_p))
    b2_p = pad(b2.reshape(1, dim), (1, dim_p))

    if n_k == 1:
        grid = (n_rows,)
        in_specs = [
            pl.BlockSpec((tm, dim_p), lambda i: (i, 0)),
            _const_block_spec((dim_p, hid_p), lambda i: (0, 0), dim_p * hid_p * bpe_w),
            _const_block_spec((1, hid_p), lambda i: (0, 0), hid_p * bpe_w),
            _const_block_spec((hid_p, dim_p), lambda i: (0, 0), hid_p * dim_p * bpe_w),
            _const_block_spec((1, dim_p), lambda i: (0, 0), dim_p * bpe_w),
        ]
        out_specs = pl.BlockSpec((tm, dim_p), lambda i: (i, 0))
        scratch_shapes = []
        kernel = functools.partial(_ffn_kernel_resident,
                                   approximate_gelu=approximate_gelu)
        dims = ("parallel",)
    else:
        grid = (n_rows, n_k)
        in_specs = [
            pl.BlockSpec((tm, dim_p), lambda i, k: (i, 0)),
            pl.BlockSpec((dim_p, th), lambda i, k: (0, k)),
            pl.BlockSpec((1, th), lambda i, k: (0, k)),
            pl.BlockSpec((th, dim_p), lambda i, k: (k, 0)),
            _const_block_spec((1, dim_p), lambda i, k: (0, 0), dim_p * bpe_w),
        ]
        out_specs = pl.BlockSpec((tm, dim_p), lambda i, k: (i, 0))
        scratch_shapes = [pltpu.VMEM((tm, dim_p), jnp.float32)]
        kernel = functools.partial(_ffn_kernel_streamed,
                                   approximate_gelu=approximate_gelu)
        dims = ("parallel", "arbitrary")

    # Conservative (2x-buffered) footprint estimate for the scoped-VMEM request.
    need = (4 * tm * dim_p * bpe_x
            + 2 * (dim_p * th + th * dim_p + 8 * th + 8 * dim_p) * bpe_w
            + (tm * dim_p * 4 if n_k > 1 else 0))
    vmem_limit = int(min(cap, max(32 * _MiB, int(need * 1.5))))

    weight_passes = 1 if n_k == 1 else n_rows  # resident weights stream once total
    cost = pl.CostEstimate(
        flops=4 * m_p * dim_p * hid_p,
        transcendentals=m_p * hid_p,
        bytes_accessed=(2 * m_p * dim_p * bpe_x
                        + weight_passes * (2 * dim_p * hid_p + hid_p + dim_p) * bpe_w),
    )

    out2d = pl.pallas_call(
        kernel,
        out_shape=jax.ShapeDtypeStruct((m_p, dim_p), x.dtype),
        grid_spec=pltpu.PrefetchScalarGridSpec(
            num_scalar_prefetch=0,
            grid=grid,
            in_specs=in_specs,
            out_specs=out_specs,
            scratch_shapes=scratch_shapes,
        ),
        compiler_params=pltpu.CompilerParams(
            dimension_semantics=dims,
            vmem_limit_bytes=vmem_limit,
        ),
        cost_estimate=cost,
    )(x2d, w1_p, b1_p, w2_p, b2_p)

    return out2d[:M, :dim].reshape(B, N, dim)


def _reference(x, w1, b1, w2, b2):
    h = x @ w1 + b1
    h = 0.5 * h * (1.0 + lax.erf(h * _INV_SQRT2))
    return h @ w2 + b2


if __name__ == "__main__":
    key = jax.random.PRNGKey(0)

    # --- resident-weights path (the common case) ---
    B, N, dim, hidden = 2, 8, 32, 64
    kx, k1, kb1, k2, kb2, k3 = jax.random.split(key, 6)
    x = jax.random.normal(kx, (B, N, dim), dtype=jnp.float32)
    # PyTorch Linear weights stored already transposed for row-major matmul:
    # W1: (dim, hidden), W2: (hidden, dim).
    w1 = jax.random.normal(k1, (dim, hidden), dtype=jnp.float32) * 0.05
    b1 = jax.random.normal(kb1, (hidden,), dtype=jnp.float32) * 0.01
    w2 = jax.random.normal(k2, (hidden, dim), dtype=jnp.float32) * 0.05
    b2 = jax.random.normal(kb2, (dim,), dtype=jnp.float32) * 0.01

    out = jax.block_until_ready(feed_forward(x, w1, b1, w2, b2))
    ref = _reference(x, w1, b1, w2, b2)
    assert out.shape == (B, N, dim)
    assert jnp.allclose(out, ref, atol=1e-5, rtol=1e-5), "resident path mismatch"

    # --- streamed-hidden path (forced via a tiny VMEM budget, exercises the
    #     accumulator kernel that large dim/hidden would use) ---
    hidden2 = 512
    w1s = jax.random.normal(k3, (dim, hidden2), dtype=jnp.float32) * 0.05
    b1s = jnp.zeros((hidden2,), dtype=jnp.float32)
    w2s = jax.random.normal(k2, (hidden2, dim), dtype=jnp.float32) * 0.05
    out_s = jax.block_until_ready(
        feed_forward(x, w1s, b1s, w2s, b2, vmem_budget_bytes=400_000))
    ref_s = _reference(x, w1s, b1s, w2s, b2)
    assert jnp.allclose(out_s, ref_s, atol=1e-5, rtol=1e-5), "streamed path mismatch"

    print("KERNEL_OK")
</pallas_src>

<mosaic_0001>
module attributes {stable_mosaic.version = 11 : i64} {
  func.func @_ffn_kernel_resident(%arg0: i32, %arg1: memref<16x128xf32, #tpu.memory_space<vmem>>, %arg2: memref<128x128xf32, #tpu.memory_space<vmem>>, %arg3: memref<1x128xf32, #tpu.memory_space<vmem>>, %arg4: memref<128x128xf32, #tpu.memory_space<vmem>>, %arg5: memref<1x128xf32, #tpu.memory_space<vmem>>, %arg6: memref<16x128xf32, #tpu.memory_space<vmem>>) attributes {dimension_semantics = [#tpu.dimension_semantics<parallel>], iteration_bounds = array<i64: 1>, scalar_prefetch = 0 : i64, scratch_operands = 0 : i64, tpu.core_type = #tpu.core_type<tc>, window_params = [{transform_indices = @transform_0, window_bounds = array<i64: 16, 128>}, {pipeline_mode = #tpu.pipeline_mode<synchronous>, transform_indices = @transform_1, window_bounds = array<i64: 128, 128>}, {pipeline_mode = #tpu.pipeline_mode<synchronous>, transform_indices = @transform_2, window_bounds = array<i64: 1, 128>}, {pipeline_mode = #tpu.pipeline_mode<synchronous>, transform_indices = @transform_3, window_bounds = array<i64: 128, 128>}, {pipeline_mode = #tpu.pipeline_mode<synchronous>, transform_indices = @transform_4, window_bounds = array<i64: 1, 128>}, {transform_indices = @transform_5, window_bounds = array<i64: 16, 128>}]} {
    %c0 = arith.constant 0 : index
    %c0_0 = arith.constant 0 : index
    %0 = vector.load %arg1[%c0, %c0_0] : memref<16x128xf32, #tpu.memory_space<vmem>>, vector<16x128xf32>
    %c0_1 = arith.constant 0 : index
    %c0_2 = arith.constant 0 : index
    %1 = vector.load %arg2[%c0_1, %c0_2] : memref<128x128xf32, #tpu.memory_space<vmem>>, vector<128x128xf32>
    %cst = arith.constant dense<0.000000e+00> : vector<16x128xf32>
    %2 = tpu.matmul %0, %1, %cst {dimension_numbers = #tpu.dot_dimension_numbers<[1], [0], [0], [1], [0, 0, 1, 1], [], []>} : vector<16x128xf32>, vector<128x128xf32>, vector<16x128xf32> -> vector<16x128xf32>
    %c0_3 = arith.constant 0 : index
    %c0_4 = arith.constant 0 : index
    %3 = vector.load %arg3[%c0_3, %c0_4] : memref<1x128xf32, #tpu.memory_space<vmem>>, vector<1x128xf32>
    %4 = vector.broadcast %3 : vector<1x128xf32> to vector<16x128xf32>
    %5 = arith.addf %2, %4 : vector<16x128xf32>
    %cst_5 = arith.constant 5.000000e-01 : f32
    %6 = vector.broadcast %cst_5 : f32 to vector<16x128xf32>
    %7 = arith.mulf %6, %5 : vector<16x128xf32>
    %cst_6 = arith.constant 0.707106769 : f32
    %8 = vector.broadcast %cst_6 : f32 to vector<16x128xf32>
    %9 = arith.mulf %5, %8 : vector<16x128xf32>
    %10 = math.erf %9 : vector<16x128xf32>
    %cst_7 = arith.constant 1.000000e+00 : f32
    %11 = vector.broadcast %cst_7 : f32 to vector<16x128xf32>
    %12 = arith.addf %11, %10 : vector<16x128xf32>
    %13 = arith.mulf %7, %12 : vector<16x128xf32>
    %c0_8 = arith.constant 0 : index
    %c0_9 = arith.constant 0 : index
    %14 = vector.load %arg4[%c0_8, %c0_9] : memref<128x128xf32, #tpu.memory_space<vmem>>, vector<128x128xf32>
    %cst_10 = arith.constant dense<0.000000e+00> : vector<16x128xf32>
    %15 = tpu.matmul %13, %14, %cst_10 {dimension_numbers = #tpu.dot_dimension_numbers<[1], [0], [0], [1], [0, 0, 1, 1], [], []>} : vector<16x128xf32>, vector<128x128xf32>, vector<16x128xf32> -> vector<16x128xf32>
    %c0_11 = arith.constant 0 : index
    %c0_12 = arith.constant 0 : index
    %16 = vector.load %arg5[%c0_11, %c0_12] : memref<1x128xf32, #tpu.memory_space<vmem>>, vector<1x128xf32>
    %17 = vector.broadcast %16 : vector<1x128xf32> to vector<16x128xf32>
    %18 = arith.addf %15, %17 : vector<16x128xf32>
    %c0_13 = arith.constant 0 : index
    %c0_14 = arith.constant 0 : index
    %19 = vector.load %arg6[%c0_13, %c0_14] : memref<16x128xf32, #tpu.memory_space<vmem>>, vector<16x128xf32>
    tpu.vector_store %arg6[%c0_13, %c0_14], %18 {strides = array<i32>} : memref<16x128xf32, #tpu.memory_space<vmem>>, vector<16x128xf32>,
    return
  }
  func.func @transform_0(%arg0: i32) -> (i32, i32) {
    %c0_i32 = arith.constant 0 : i32
    %c0_i32_0 = arith.constant 0 : i32
    return %arg0, %c0_i32 : i32, i32
  }
  func.func @transform_1(%arg0: i32) -> (i32, i32) {
    %c0_i32 = arith.constant 0 : i32
    %c0_i32_0 = arith.constant 0 : i32
    %c0_i32_1 = arith.constant 0 : i32
    return %c0_i32, %c0_i32_0 : i32, i32
  }
  func.func @transform_2(%arg0: i32) -> (i32, i32) {
    %c0_i32 = arith.constant 0 : i32
    %c0_i32_0 = arith.constant 0 : i32
    %c0_i32_1 = arith.constant 0 : i32
    return %c0_i32, %c0_i32_0 : i32, i32
  }
  func.func @transform_3(%arg0: i32) -> (i32, i32) {
    %c0_i32 = arith.constant 0 : i32
    %c0_i32_0 = arith.constant 0 : i32
    %c0_i32_1 = arith.constant 0 : i32
    return %c0_i32, %c0_i32_0 : i32, i32
  }
  func.func @transform_4(%arg0: i32) -> (i32, i32) {
    %c0_i32 = arith.constant 0 : i32
    %c0_i32_0 = arith.constant 0 : i32
    %c0_i32_1 = arith.constant 0 : i32
    return %c0_i32, %c0_i32_0 : i32, i32
  }
  func.func @transform_5(%arg0: i32) -> (i32, i32) {
    %c0_i32 = arith.constant 0 : i32
    %c0_i32_0 = arith.constant 0 : i32
    return %arg0, %c0_i32 : i32, i32
  }
}

</mosaic_0001>

<llo_original>
// kernel: tpu_custom_call.1
$region0: #{tpu_custom_call.1}
  #allocation0 [shape = 'u32[]', space=smem, size = 0x4, offset = 0x4, fixed_abs, tag = 'smem constant byte address 0x4 - core index']
  #allocation1 [shape = 'u32[72,128]{1,0:T(1,128)}', space=vmem, size = 0x9000, scoped, tag = 'internal scratch']
  %s0 = inlined_call_operand.hbm [shape: f32[16,128], index: 0, kind: input, shape index: {}]
  %s1 = inlined_call_operand.hbm [shape: f32[128,128], index: 1, kind: input, shape index: {}]
  %s2 = inlined_call_operand.vmem [shape: f32[1,128], index: 2, kind: input, shape index: {}]
  %s3 = inlined_call_operand.hbm [shape: f32[128,128], index: 3, kind: input, shape index: {}]
  %s4 = inlined_call_operand.vmem [shape: f32[1,128], index: 4, kind: input, shape index: {}]
  %s5 = inlined_call_operand.hbm [shape: f32[16,128], index: 5, kind: output, shape index: {}]
  %s6 = sld [smem:[#allocation0]]
  $region42: #{tpu_custom_call.1} parent=0
    _
  %s8 = ssub.s32 1, %s6
  %s9 = scalar_select 0, %s8, %s6
  $region1: #{tpu_custom_call.1} parent=0
    #allocation2 [shape = 'u8[8192]{0}', space=vmem, size = 0x2000, scoped, tag = 'input window, operand 0, single buffered']
    #allocation3 [shape = 's32[1]{0}', space=sflag, size = 0x4, scoped, tag = 'scoped memory for tpu_custom_call.1']
    #allocation4 [shape = 's32[1]{0}', space=sflag, size = 0x4, scoped, tag = 'scoped memory for tpu_custom_call.1']
    #allocation5 [shape = 'u8[65536]{0}', space=vmem, size = 0x10000, scoped, tag = 'input window, operand 1, single buffered']
    #allocation6 [shape = 's32[1]{0}', space=sflag, size = 0x4, scoped, tag = 'scoped memory for tpu_custom_call.1']
    #allocation7 [shape = 'u8[65536]{0}', space=vmem, size = 0x10000, scoped, tag = 'input window, operand 3, single buffered']
    #allocation8 [shape = 'u8[8192]{0}', space=vmem, size = 0x2000, scoped, tag = 'output window, operand 0, single buffered']
    %10 = vsyncpa [#allocation3], 0
    %11 = vsyncpa [#allocation6], 0
    %12 = vsyncpa [#allocation4], 0
    // Predicated region
    $region2: #{tpu_custom_call.1} parent=1 // pred_check
      _
    $region3: #{tpu_custom_call.1} parent=1 // pred_check_branch
      %14 = sbr.rel (0) target = $region5
    $region4: #{tpu_custom_call.1} parent=1 // pred_region
      %16 = vsyncadd [#allocation3], 0
      %s17 = sshll.u32 %s0, 4
      %s18 = int_to_ptr.hbm [resolvable:$true] %s17
      %s19 = sshll.u32 [#allocation2], 4
      %s20 = int_to_ptr.vmem [resolvable:$true] %s19
      %25 = dma.hbm_to_vmem [thread:$0]  %s18, 256, %s20, [#allocation3], 128, 128, 8
    $region5: #{tpu_custom_call.1} parent=1 // pred_fallthru
      _
    // Predicated region
    $region6: #{tpu_custom_call.1} parent=1 // pred_check
      _
    $region7: #{tpu_custom_call.1} parent=1 // pred_check_branch
      %27 = sbr.rel (0) target = $region9
    $region8: #{tpu_custom_call.1} parent=1 // pred_region
      %29 = vsyncadd [#allocation6], 0
      %s30 = sshll.u32 %s1, 4
      %s31 = int_to_ptr.hbm [resolvable:$true] %s30
      %s32 = sshll.u32 [#allocation5], 4
      %s33 = int_to_ptr.vmem [resolvable:$true] %s32
      %38 = dma.hbm_to_vmem [thread:$0]  %s31, 2048, %s33, [#allocation6], 128, 128, 8
    $region9: #{tpu_custom_call.1} parent=1 // pred_fallthru
      _
    // Predicated region
    $region10: #{tpu_custom_call.1} parent=1 // pred_check
      _
    $region11: #{tpu_custom_call.1} parent=1 // pred_check_branch
      %40 = sbr.rel (0) target = $region13
    $region12: #{tpu_custom_call.1} parent=1 // pred_region
      _
    $region13: #{tpu_custom_call.1} parent=1 // pred_fallthru
      _
    // Predicated region
    $region14: #{tpu_custom_call.1} parent=1 // pred_check
      _
    $region15: #{tpu_custom_call.1} parent=1 // pred_check_branch
      %42 = sbr.rel (0) target = $region17
    $region16: #{tpu_custom_call.1} parent=1 // pred_region
      %44 = vsyncadd [#allocation6], 0
      %s45 = sshll.u32 %s3, 4
      %s46 = int_to_ptr.hbm [resolvable:$true] %s45
      %s47 = sshll.u32 [#allocation7], 4
      %s48 = int_to_ptr.vmem [resolvable:$true] %s47
      %53 = dma.hbm_to_vmem [thread:$0]  %s46, 2048, %s48, [#allocation6], 128, 128, 8
    $region17: #{tpu_custom_call.1} parent=1 // pred_fallthru
      _
    // Predicated region
    $region18: #{tpu_custom_call.1} parent=1 // pred_check
      _
    $region19: #{tpu_custom_call.1} parent=1 // pred_check_branch
      %55 = sbr.rel (0) target = $region21
    $region20: #{tpu_custom_call.1} parent=1 // pred_region
      _
    $region21: #{tpu_custom_call.1} parent=1 // pred_fallthru
      _
    // Predicated region
    $region22: #{tpu_custom_call.1} parent=1 // pred_check
      _
    $region23: #{tpu_custom_call.1} parent=1 // pred_check_branch
      %57 = sbr.rel (0) target = $region25
    $region24: #{tpu_custom_call.1} parent=1 // pred_region
      %59 = dma.done [#allocation3], 256
    $region25: #{tpu_custom_call.1} parent=1 // pred_fallthru
      _
    // Predicated region
    $region26: #{tpu_custom_call.1} parent=1 // pred_check
      _
    $region27: #{tpu_custom_call.1} parent=1 // pred_check_branch
      %61 = sbr.rel (0) target = $region29
    $region28: #{tpu_custom_call.1} parent=1 // pred_region
      %63 = dma.done [#allocation6], 2048
    $region29: #{tpu_custom_call.1} parent=1 // pred_fallthru
      _
    // Predicated region
    $region30: #{tpu_custom_call.1} parent=1 // pred_check
      _
    $region31: #{tpu_custom_call.1} parent=1 // pred_check_branch
      %65 = sbr.rel (0) target = $region33
    $region32: #{tpu_custom_call.1} parent=1 // pred_region
      %67 = dma.done [#allocation6], 2048
    $region33: #{tpu_custom_call.1} parent=1 // pred_fallthru
      _
    %v68 = vld [vmem:[#allocation2] sm:$0xff]
    %v69 = vld [vmem:[#allocation2 + $0x8] sm:$0xff]
    %v70 = vld [vmem:[#allocation5] sm:$0xff]
    %v71 = vld [vmem:[#allocation5 + $0x8] sm:$0xff]
    %v72 = vld [vmem:[#allocation5 + $0x10] sm:$0xff]
    %v73 = vld [vmem:[#allocation5 + $0x18] sm:$0xff]
    %v74 = vld [vmem:[#allocation5 + $0x20] sm:$0xff]
    %v75 = vld [vmem:[#allocation5 + $0x28] sm:$0xff]
    %v76 = vld [vmem:[#allocation5 + $0x30] sm:$0xff]
    %v77 = vld [vmem:[#allocation5 + $0x38] sm:$0xff]
    %v78 = vld [vmem:[#allocation5 + $0x40] sm:$0xff]
    %v79 = vld [vmem:[#allocation5 + $0x48] sm:$0xff]
    %v80 = vld [vmem:[#allocation5 + $0x50] sm:$0xff]
    %v81 = vld [vmem:[#allocation5 + $0x58] sm:$0xff]
    %v82 = vld [vmem:[#allocation5 + $0x60] sm:$0xff]
    %v83 = vld [vmem:[#allocation5 + $0x68] sm:$0xff]
    %v84 = vld [vmem:[#allocation5 + $0x70] sm:$0xff]
    %v85 = vld [vmem:[#allocation5 + $0x78] sm:$0xff]
    %v86 = vld [vmem:[%s2] sm:$0x1]
    %v88 = vperm.slane %v86, 0
    %90 = vmatpush.msra.mxu0 %v85
    %91 = vmatpush.msra.mxu0 %v84
    %92 = vmatpush.msra.mxu0 %v83
    %93 = vmatpush.msra.mxu0 %v82
    %94 = vmatpush.msra.mxu0 %v81
    %95 = vmatpush.msra.mxu0 %v80
    %96 = vmatpush.msra.mxu0 %v79
    %97 = vmatpush.msra.mxu0 %v78
    %98 = vmatpush.msra.mxu0 %v77
    %99 = vmatpush.msra.mxu0 %v76
    %100 = vmatpush.msra.mxu0 %v75
    %101 = vmatpush.msra.mxu0 %v74
    %102 = vmatpush.msra.mxu0 %v73
    %103 = vmatpush.msra.mxu0 %v72
    %104 = vmatpush.msra.mxu0 %v71
    %105 = vmatpush.msra.mxu0 %v70
    %106 = vmatmul.f32.gmra.mxu0 %v68
    %v107 = vpop.f32.mrf.mxu0
    %v108 = vadd.f32 %v88, %v107
    %109 = vmatmul.f32.gmra.mxu0 %v69
    %v110 = vpop.f32.mrf.mxu0
    %v111 = vadd.f32 %v88, %v110
    %112 = vdwg.mxu0
    %v113 = vmul.f32 %v108, 0.5
    %v114 = vmul.f32 %v111, 0.5
    %v115 = vmul.f32 %v108, 0.70710677
    %v116 = vmul.f32 %v111, 0.70710677
    %v117 = vmul.f32 %v115, %v115
    %v118 = vmin.f32 16.0, %v117
    %v119 = vmul.f32 %v118, 2.1237322e-06
    %v120 = vadd.f32 %v119, 0.00028619796
    %v121 = vmul.f32 %v118, %v120
    %v122 = vadd.f32 %v121, 0.0036580483
    %v123 = vmul.f32 %v118, %v122
    %v124 = vadd.f32 %v123, 0.05243302
    %v125 = vmul.f32 %v118, %v124
    %v126 = vadd.f32 %v125, 0.18741608
    %v127 = vmul.f32 %v118, %v126
    %v128 = vadd.f32 %v127, 1.1283791
    %v129 = vmul.f32 %v115, %v128
    %v130 = vmul.f32 %v118, 3.8918573e-05
    %v131 = vadd.f32 %v130, 0.001143296
    %v132 = vmul.f32 %v118, %v131
    %v133 = vadd.f32 %v132, 0.014752088
    %v134 = vmul.f32 %v118, %v133
    %v135 = vadd.f32 %v134, 0.112945676
    %v136 = vmul.f32 %v118, %v135
    %v137 = vadd.f32 %v136, 0.4994258
    %v138 = vmul.f32 %v118, %v137
    %v139 = vadd.f32 %v138, 1.0
    %v140 = vrcp.pop %v139
    %v141 = vmul.f32 %v139, %v140
    %v142 = vsub.f32 1.0, %v141
    %v143 = vmul.f32 %v140, %v142
    %v144 = vadd.f32 %v140, %v143
    %vm145 = vweird.f32 %v139
    %vm146 = vweird.f32 %v140
    %vm147 = vmor %vm145, %vm146
    %v148 = vsel %vm147, %v140, %v144
    %v149 = vand.u32 2147483647, %v139
    %vm150 = vcmp.eq.f32.partialorder %v149, 8.507059e+37
    %v151 = vand.u32 %v139, 2147483648
    %v152 = vor.u32 1.1754944e-38, %v151
    %v153 = vsel %vm150, %v152, %v148
    %v154 = vmul.f32 %v129, %v153
    %v155 = vmin.f32 %v154, 1.0
    %v156 = vmax.f32 %v155, -1.0
    %v157 = vmul.f32 %v116, %v116
    %v158 = vmin.f32 16.0, %v157
    %v159 = vmul.f32 %v158, 2.1237322e-06
    %v160 = vadd.f32 %v159, 0.00028619796
    %v161 = vmul.f32 %v158, %v160
    %v162 = vadd.f32 %v161, 0.0036580483
    %v163 = vmul.f32 %v158, %v162
    %v164 = vadd.f32 %v163, 0.05243302
    %v165 = vmul.f32 %v158, %v164
    %v166 = vadd.f32 %v165, 0.18741608
    %v167 = vmul.f32 %v158, %v166
    %v168 = vadd.f32 %v167, 1.1283791
    %v169 = vmul.f32 %v116, %v168
    %v170 = vmul.f32 %v158, 3.8918573e-05
    %v171 = vadd.f32 %v170, 0.001143296
    %v172 = vmul.f32 %v158, %v171
    %v173 = vadd.f32 %v172, 0.014752088
    %v174 = vmul.f32 %v158, %v173
    %v175 = vadd.f32 %v174, 0.112945676
    %v176 = vmul.f32 %v158, %v175
    %v177 = vadd.f32 %v176, 0.4994258
    %v178 = vmul.f32 %v158, %v177
    %v179 = vadd.f32 %v178, 1.0
    %v180 = vrcp.pop %v179
    %v181 = vmul.f32 %v179, %v180
    %v182 = vsub.f32 1.0, %v181
    %v183 = vmul.f32 %v180, %v182
    %v184 = vadd.f32 %v180, %v183
    %vm185 = vweird.f32 %v179
    %vm186 = vweird.f32 %v180
    %vm187 = vmor %vm185, %vm186
    %v188 = vsel %vm187, %v180, %v184
    %v189 = vand.u32 2147483647, %v179
    %vm190 = vcmp.eq.f32.partialorder %v189, 8.507059e+37
    %v191 = vand.u32 %v179, 2147483648
    %v192 = vor.u32 1.1754944e-38, %v191
    %v193 = vsel %vm190, %v192, %v188
    %v194 = vmul.f32 %v169, %v193
    %v195 = vmin.f32 %v194, 1.0
    %v196 = vmax.f32 %v195, -1.0
    %v197 = vadd.f32 %v156, 1.0
    %v198 = vadd.f32 %v196, 1.0
    %v199 = vmul.f32 %v113, %v197
    %v200 = vmul.f32 %v114, %v198
    %v201 = vld [vmem:[#allocation7] sm:$0xff]
    %v202 = vld [vmem:[#allocation7 + $0x8] sm:$0xff]
    %v203 = vld [vmem:[#allocation7 + $0x10] sm:$0xff]
    %v204 = vld [vmem:[#allocation7 + $0x18] sm:$0xff]
    %v205 = vld [vmem:[#allocation7 + $0x20] sm:$0xff]
    %v206 = vld [vmem:[#allocation7 + $0x28] sm:$0xff]
    %v207 = vld [vmem:[#allocation7 + $0x30] sm:$0xff]
    %v208 = vld [vmem:[#allocation7 + $0x38] sm:$0xff]
    %v209 = vld [vmem:[#allocation7 + $0x40] sm:$0xff]
    %v210 = vld [vmem:[#allocation7 + $0x48] sm:$0xff]
    %v211 = vld [vmem:[#allocation7 + $0x50] sm:$0xff]
    %v212 = vld [vmem:[#allocation7 + $0x58] sm:$0xff]
    %v213 = vld [vmem:[#allocation7 + $0x60] sm:$0xff]
    %v214 = vld [vmem:[#allocation7 + $0x68] sm:$0xff]
    %v215 = vld [vmem:[#allocation7 + $0x70] sm:$0xff]
    %v216 = vld [vmem:[#allocation7 + $0x78] sm:$0xff]
    %v217 = vld [vmem:[%s4] sm:$0x1]
    %v219 = vperm.slane %v217, 0
    %221 = vmatpush.msra.mxu0 %v216
    %222 = vmatpush.msra.mxu0 %v215
    %223 = vmatpush.msra.mxu0 %v214
    %224 = vmatpush.msra.mxu0 %v213
    %225 = vmatpush.msra.mxu0 %v212
    %226 = vmatpush.msra.mxu0 %v211
    %227 = vmatpush.msra.mxu0 %v210
    %228 = vmatpush.msra.mxu0 %v209
    %229 = vmatpush.msra.mxu0 %v208
    %230 = vmatpush.msra.mxu0 %v207
    %231 = vmatpush.msra.mxu0 %v206
    %232 = vmatpush.msra.mxu0 %v205
    %233 = vmatpush.msra.mxu0 %v204
    %234 = vmatpush.msra.mxu0 %v203
    %235 = vmatpush.msra.mxu0 %v202
    %236 = vmatpush.msra.mxu0 %v201
    %237 = vmatmul.f32.gmra.mxu0 %v199
    %v238 = vpop.f32.mrf.mxu0
    %v239 = vadd.f32 %v219, %v238
    %240 = vmatmul.f32.gmra.mxu0 %v200
    %v241 = vpop.f32.mrf.mxu0
    %v242 = vadd.f32 %v219, %v241
    %243 = vdwg.mxu0
    %244 = vst [vmem:[#allocation8] sm:$0xff] %v239
    %245 = vst [vmem:[#allocation8 + $0x8] sm:$0xff] %v242
    // Predicated region
    $region34: #{tpu_custom_call.1} parent=1 // pred_check
      _
    $region35: #{tpu_custom_call.1} parent=1 // pred_check_branch
      %247 = sbr.rel (0) target = $region37
    $region36: #{tpu_custom_call.1} parent=1 // pred_region
      %249 = vsyncadd [#allocation4], 0
      %s250 = sshll.u32 [#allocation8], 4
      %s251 = int_to_ptr.vmem [resolvable:$true] %s250
      %s252 = sshll.u32 %s5, 4
      %s253 = int_to_ptr.hbm [resolvable:$true] %s252
      %258 = dma.vmem_to_hbm [thread:$0]  %s251, 256, %s253, [#allocation4], 128, 128, 8
    $region37: #{tpu_custom_call.1} parent=1 // pred_fallthru
      _
    // Predicated region
    $region38: #{tpu_custom_call.1} parent=1 // pred_check
      _
    $region39: #{tpu_custom_call.1} parent=1 // pred_check_branch
      %260 = sbr.rel (0) target = $region41
    $region40: #{tpu_custom_call.1} parent=1 // pred_region
      %262 = dma.done [#allocation4], 256
    $region41: #{tpu_custom_call.1} parent=1 // pred_fallthru
      _
    %263 = vsyncpa [#allocation3], 1
    %264 = vsyncpa [#allocation6], 1
    %265 = vsyncpa [#allocation4], 1

</llo_original>
